<compile_context>
chip_gen: v5e
topology: v5e:2x2
jax: 0.10.0
libtpu: 0.0.40
codegen_flags: <defaults>
</compile_context>

<pallas_src>
import functools
import math

import jax
import jax.numpy as jnp
from jax.experimental import pallas as pl
from jax.experimental.pallas import tpu as pltpu


def _layernorm_kernel(x_ref, w_ref, b_ref, o_ref, *, eps):
    # x_ref: (block_rows, H) tile in VMEM; w_ref/b_ref: (1, H).
    # One-pass moments with f32 accumulation.  The casts feed the reductions
    # directly, so no full-tile f32 copy of x needs to stay live across the
    # whole body (keeps VMEM pressure low; matters most on v7x's 64 MiB VMEM).
    h = x_ref.shape[-1]
    inv_h = 1.0 / h

    xf = x_ref[...].astype(jnp.float32)
    row_sum = jnp.sum(xf, axis=-1, keepdims=True)
    row_sumsq = jnp.sum(xf * xf, axis=-1, keepdims=True)

    mean = row_sum * inv_h
    # Biased variance (matches .pow(2).mean(-1)); guard tiny negative from
    # the E[x^2] - E[x]^2 cancellation.
    var = jnp.maximum(row_sumsq * inv_h - mean * mean, 0.0)
    inv = jax.lax.rsqrt(var + eps)          # EUP rsqrt (off the VALU slot)

    w = w_ref[...].astype(jnp.float32)
    b = b_ref[...].astype(jnp.float32)

    # Single fused elementwise chain.  Re-reading x_ref here (cheap VMEM vld)
    # instead of reusing `xf` avoids keeping a full-tile f32 value alive
    # across the reductions above.
    y = ((x_ref[...].astype(jnp.float32) - mean) * inv) * w + b
    o_ref[...] = y.astype(o_ref.dtype)


def _choose_block_rows(rows, hidden, itemsize):
    """Pick a sublane-aligned row tile; prefer exact divisors of rows."""
    sublane = max(8, 32 // itemsize)          # 8 for f32, 16 for bf16
    if rows <= sublane:
        return rows                           # single full-extent block

    row_bytes = hidden * itemsize
    # Honest per-row working-set cost:
    #   2x double-buffered input + output tiles in the input dtype (4*itemsize)
    #   + ~2 full-tile f32 intermediates inside the kernel body (2*4 bytes).
    # A ~26 MiB budget keeps the whole pipeline under the explicit 32 MiB
    # vmem limit on every chip.
    budget_bytes = 26 * 1024 * 1024
    per_row_cost = hidden * (4 * itemsize + 2 * 4)
    cap = max(sublane, budget_bytes // per_row_cost)
    cap = min(cap, rows)

    # Prefer >= 4 grid steps (>= 2 per TensorCore on v7x) when rows allow,
    # but never shrink a tile below ~2 MiB just to add steps.
    min_rows_2mib = max(sublane, (2 * 1024 * 1024) // row_bytes)
    four_step_block = rows // 4
    if four_step_block >= min_rows_2mib:
        cap = min(cap, four_step_block)
    cap = max(sublane, (cap // sublane) * sublane)

    # Exact, sublane-aligned divisor of rows at or below cap -> no padding,
    # no extra HBM round trip in the wrapper.
    for b in range(cap, sublane - 1, -sublane):
        if rows % b == 0:
            return b

    # No aligned divisor: if the whole slab fits the working-set budget, run
    # it as one full-extent block (still no padding).
    if rows * per_row_cost <= budget_bytes:
        return rows

    # Last resort: minimal padding — split into ceil(rows/cap) blocks and
    # round the block up to the sublane.
    n_blocks = -(-rows // cap)
    block = -(-rows // n_blocks)
    return -(-block // sublane) * sublane


def gpt2_layernorm(x, weight, bias, *, eps=1e-5, block_rows=None):
    """x: (..., H); weight, bias: (H,). Returns same shape/dtype as x."""
    orig_shape = x.shape
    H = orig_shape[-1]
    rows = math.prod(orig_shape[:-1]) if len(orig_shape) > 1 else 1

    x2 = x.reshape(rows, H)
    w2 = weight.reshape(1, H)
    b2 = bias.reshape(1, H)

    itemsize = jnp.dtype(x.dtype).itemsize
    if block_rows is None:
        block_rows = _choose_block_rows(rows, H, itemsize)

    # Padding only as a last resort (block_rows is chosen as an exact divisor
    # of rows whenever one exists).  Rows are independent in LayerNorm, so
    # zero-padded rows never contaminate real outputs (rsqrt(eps) is finite).
    n_blocks = pl.cdiv(rows, block_rows)
    rows_p = n_blocks * block_rows
    padded = rows_p != rows
    if padded:
        x2 = jnp.pad(x2, ((0, rows_p - rows), (0, 0)))

    # Advisory cost hint: memory-bound streaming kernel.
    cost = pl.CostEstimate(
        flops=8 * rows_p * H,
        transcendentals=rows_p,
        bytes_accessed=2 * rows_p * H * itemsize
        + H * jnp.dtype(weight.dtype).itemsize
        + H * jnp.dtype(bias.dtype).itemsize,
    )

    # Lane density: GPT-2 H = 768/1024 are multiples of 128 (fully lane-dense
    # stores).  H = 1600 (GPT-2 XL) is 12.5 x 128, so 1 of its 13 lane tiles
    # lowers to a masked vst — a small cost; pad the hidden dim to 1664 at the
    # caller only if profiling shows it matters.  The toy H=32 in __main__ is
    # fully masked, which is fine at that scale.
    out = pl.pallas_call(
        functools.partial(_layernorm_kernel, eps=eps),
        out_shape=jax.ShapeDtypeStruct((rows_p, H), x.dtype),
        grid_spec=pltpu.PrefetchScalarGridSpec(
            num_scalar_prefetch=0,
            grid=(n_blocks,),
            in_specs=[
                pl.BlockSpec((block_rows, H), lambda i: (i, 0)),
                pl.BlockSpec((1, H), lambda i: (0, 0)),
                pl.BlockSpec((1, H), lambda i: (0, 0)),
            ],
            out_specs=pl.BlockSpec((block_rows, H), lambda i: (i, 0)),
        ),
        compiler_params=pltpu.CompilerParams(
            dimension_semantics=("parallel",),
            # Explicit scoped-VMEM limit: the ~26 MiB working-set budget
            # (double-buffered in/out tiles + f32 intermediates) fits with
            # headroom, and 32 MiB is valid on v5e/v6e (128 MiB physical)
            # and v7x (64 MiB physical) alike.
            vmem_limit_bytes=32 * 1024 * 1024,
        ),
        cost_estimate=cost,
    )(x2, w2, b2)

    if padded:
        out = out[:rows]
    return out.reshape(orig_shape)


if __name__ == "__main__":
    key = jax.random.PRNGKey(0)
    batch, seq, hidden = 2, 8, 32

    # Deterministic parameter init matching the module's __init__:
    # weight = ones(hidden), bias = zeros(hidden)
    weight = jnp.ones((hidden,), dtype=jnp.float32)
    bias = jnp.zeros((hidden,), dtype=jnp.float32)

    x = jax.random.normal(key, (batch, seq, hidden), dtype=jnp.float32)

    y = gpt2_layernorm(x, weight, bias)
    y = jax.block_until_ready(y)

    # Reference check in plain JAX (same math as the PyTorch forward).
    u = x.mean(-1, keepdims=True)
    s = ((x - u) ** 2).mean(-1, keepdims=True)
    ref = weight * ((x - u) / jnp.sqrt(s + 1e-05)) + bias
    assert y.shape == x.shape and y.dtype == x.dtype
    assert jnp.allclose(y, ref, atol=1e-5, rtol=1e-5)

    print("KERNEL_OK")
</pallas_src>

<mosaic_0001>
module attributes {stable_mosaic.version = 11 : i64} {
  func.func @_layernorm_kernel(%arg0: i32, %arg1: memref<16x32xf32, #tpu.memory_space<vmem>>, %arg2: memref<1x32xf32, #tpu.memory_space<vmem>>, %arg3: memref<1x32xf32, #tpu.memory_space<vmem>>, %arg4: memref<16x32xf32, #tpu.memory_space<vmem>>) attributes {dimension_semantics = [#tpu.dimension_semantics<parallel>], iteration_bounds = array<i64: 1>, scalar_prefetch = 0 : i64, scratch_operands = 0 : i64, tpu.core_type = #tpu.core_type<tc>, window_params = [{transform_indices = @transform_0, window_bounds = array<i64: 16, 32>}, {pipeline_mode = #tpu.pipeline_mode<synchronous>, transform_indices = @transform_1, window_bounds = array<i64: 1, 32>}, {pipeline_mode = #tpu.pipeline_mode<synchronous>, transform_indices = @transform_2, window_bounds = array<i64: 1, 32>}, {transform_indices = @transform_3, window_bounds = array<i64: 16, 32>}]} {
    %c0 = arith.constant 0 : index
    %c0_0 = arith.constant 0 : index
    %0 = vector.load %arg1[%c0, %c0_0] : memref<16x32xf32, #tpu.memory_space<vmem>>, vector<16x32xf32>
    %cst = arith.constant dense<0.000000e+00> : vector<16xf32>
    %1 = vector.multi_reduction <add>, %0, %cst [1] : vector<16x32xf32> to vector<16xf32>
    %2 = vector.shape_cast %1 : vector<16xf32> to vector<16x1xf32>
    %3 = arith.mulf %0, %0 : vector<16x32xf32>
    %cst_1 = arith.constant dense<0.000000e+00> : vector<16xf32>
    %4 = vector.multi_reduction <add>, %3, %cst_1 [1] : vector<16x32xf32> to vector<16xf32>
    %5 = vector.shape_cast %4 : vector<16xf32> to vector<16x1xf32>
    %cst_2 = arith.constant 3.125000e-02 : f32
    %6 = vector.broadcast %cst_2 : f32 to vector<16x1xf32>
    %7 = arith.mulf %2, %6 : vector<16x1xf32>
    %cst_3 = arith.constant 3.125000e-02 : f32
    %8 = vector.broadcast %cst_3 : f32 to vector<16x1xf32>
    %9 = arith.mulf %5, %8 : vector<16x1xf32>
    %10 = arith.mulf %7, %7 : vector<16x1xf32>
    %11 = arith.subf %9, %10 : vector<16x1xf32>
    %cst_4 = arith.constant 0.000000e+00 : f32
    %12 = vector.broadcast %cst_4 : f32 to vector<16x1xf32>
    %13 = arith.maximumf %11, %12 : vector<16x1xf32>
    %cst_5 = arith.constant 9.99999974E-6 : f32
    %14 = vector.broadcast %cst_5 : f32 to vector<16x1xf32>
    %15 = arith.addf %13, %14 : vector<16x1xf32>
    %16 = math.rsqrt %15 : vector<16x1xf32>
    %c0_6 = arith.constant 0 : index
    %c0_7 = arith.constant 0 : index
    %17 = vector.load %arg2[%c0_6, %c0_7] : memref<1x32xf32, #tpu.memory_space<vmem>>, vector<1x32xf32>
    %c0_8 = arith.constant 0 : index
    %c0_9 = arith.constant 0 : index
    %18 = vector.load %arg3[%c0_8, %c0_9] : memref<1x32xf32, #tpu.memory_space<vmem>>, vector<1x32xf32>
    %c0_10 = arith.constant 0 : index
    %c0_11 = arith.constant 0 : index
    %19 = vector.load %arg1[%c0_10, %c0_11] : memref<16x32xf32, #tpu.memory_space<vmem>>, vector<16x32xf32>
    %20 = vector.broadcast %7 : vector<16x1xf32> to vector<16x32xf32>
    %21 = arith.subf %19, %20 : vector<16x32xf32>
    %22 = vector.broadcast %16 : vector<16x1xf32> to vector<16x32xf32>
    %23 = arith.mulf %21, %22 : vector<16x32xf32>
    %24 = vector.broadcast %17 : vector<1x32xf32> to vector<16x32xf32>
    %25 = arith.mulf %23, %24 : vector<16x32xf32>
    %26 = vector.broadcast %18 : vector<1x32xf32> to vector<16x32xf32>
    %27 = arith.addf %25, %26 : vector<16x32xf32>
    %c0_12 = arith.constant 0 : index
    %c0_13 = arith.constant 0 : index
    %28 = vector.load %arg4[%c0_12, %c0_13] : memref<16x32xf32, #tpu.memory_space<vmem>>, vector<16x32xf32>
    tpu.vector_store %arg4[%c0_12, %c0_13], %27 {strides = array<i32>} : memref<16x32xf32, #tpu.memory_space<vmem>>, vector<16x32xf32>,
    return
  }
  func.func @transform_0(%arg0: i32) -> (i32, i32) {
    %c0_i32 = arith.constant 0 : i32
    %c0_i32_0 = arith.constant 0 : i32
    return %arg0, %c0_i32 : i32, i32
  }
  func.func @transform_1(%arg0: i32) -> (i32, i32) {
    %c0_i32 = arith.constant 0 : i32
    %c0_i32_0 = arith.constant 0 : i32
    %c0_i32_1 = arith.constant 0 : i32
    return %c0_i32, %c0_i32_0 : i32, i32
  }
  func.func @transform_2(%arg0: i32) -> (i32, i32) {
    %c0_i32 = arith.constant 0 : i32
    %c0_i32_0 = arith.constant 0 : i32
    %c0_i32_1 = arith.constant 0 : i32
    return %c0_i32, %c0_i32_0 : i32, i32
  }
  func.func @transform_3(%arg0: i32) -> (i32, i32) {
    %c0_i32 = arith.constant 0 : i32
    %c0_i32_0 = arith.constant 0 : i32
    return %arg0, %c0_i32 : i32, i32
  }
}

</mosaic_0001>

<llo_original>
// kernel: tpu_custom_call.1
$region0: #{tpu_custom_call.1}
  #allocation0 [shape = 'u32[]', space=smem, size = 0x4, offset = 0x4, fixed_abs, tag = 'smem constant byte address 0x4 - core index']
  #allocation1 [shape = 'u32[72,128]{1,0:T(1,128)}', space=vmem, size = 0x9000, scoped, tag = 'internal scratch']
  %s0 = inlined_call_operand.hbm [shape: f32[16,32], index: 0, kind: input, shape index: {}]
  %s1 = inlined_call_operand.hbm [shape: f32[1,32], index: 1, kind: input, shape index: {}]
  %s2 = inlined_call_operand.vmem [shape: f32[1,32], index: 2, kind: input, shape index: {}]
  %s3 = inlined_call_operand.hbm [shape: f32[16,32], index: 3, kind: output, shape index: {}]
  %s4 = sld [smem:[#allocation0]]
  $region30: #{tpu_custom_call.1} parent=0
    _
  %s6 = ssub.s32 1, %s4
  %s7 = scalar_select 0, %s6, %s4
  $region1: #{tpu_custom_call.1} parent=0
    #allocation2 [shape = 'u8[8192]{0}', space=vmem, size = 0x2000, scoped, tag = 'input window, operand 0, single buffered']
    #allocation3 [shape = 's32[1]{0}', space=sflag, size = 0x4, scoped, tag = 'scoped memory for tpu_custom_call.1']
    #allocation4 [shape = 's32[1]{0}', space=sflag, size = 0x4, scoped, tag = 'scoped memory for tpu_custom_call.1']
    #allocation5 [shape = 'u8[512]{0}', space=vmem, size = 0x400, scoped, tag = 'input window, operand 1, single buffered']
    #allocation6 [shape = 's32[1]{0}', space=sflag, size = 0x4, scoped, tag = 'scoped memory for tpu_custom_call.1']
    #allocation7 [shape = 'u8[8192]{0}', space=vmem, size = 0x2000, scoped, tag = 'output window, operand 0, single buffered']
    %8 = vsyncpa [#allocation3], 0
    %9 = vsyncpa [#allocation6], 0
    %10 = vsyncpa [#allocation4], 0
    // Predicated region
    $region2: #{tpu_custom_call.1} parent=1 // pred_check
      _
    $region3: #{tpu_custom_call.1} parent=1 // pred_check_branch
      %12 = sbr.rel (0) target = $region5
    $region4: #{tpu_custom_call.1} parent=1 // pred_region
      %14 = vsyncadd [#allocation3], 0
      %s15 = sshll.u32 %s0, 4
      %s16 = int_to_ptr.hbm [resolvable:$true] %s15
      %s17 = sshll.u32 [#allocation2], 4
      %s18 = int_to_ptr.vmem [resolvable:$true] %s17
      %23 = dma.hbm_to_vmem [thread:$0]  %s16, 256, %s18, [#allocation3], 128, 128, 8
    $region5: #{tpu_custom_call.1} parent=1 // pred_fallthru
      _
    // Predicated region
    $region6: #{tpu_custom_call.1} parent=1 // pred_check
      _
    $region7: #{tpu_custom_call.1} parent=1 // pred_check_branch
      %25 = sbr.rel (0) target = $region9
    $region8: #{tpu_custom_call.1} parent=1 // pred_region
      %27 = vsyncadd [#allocation6], 0
      %s29 = sshll.u32 %s1, 4
      %s30 = int_to_ptr.hbm [resolvable:$true] %s29
      %s31 = sshll.u32 [#allocation5], 4
      %s32 = int_to_ptr.vmem [resolvable:$true] %s31
      %34 = dma.hbm_to_vmem [thread:$0]  %s30, 16, %s32, [#allocation6]
    $region9: #{tpu_custom_call.1} parent=1 // pred_fallthru
      _
    // Predicated region
    $region10: #{tpu_custom_call.1} parent=1 // pred_check
      _
    $region11: #{tpu_custom_call.1} parent=1 // pred_check_branch
      %36 = sbr.rel (0) target = $region13
    $region12: #{tpu_custom_call.1} parent=1 // pred_region
      _
    $region13: #{tpu_custom_call.1} parent=1 // pred_fallthru
      _
    // Predicated region
    $region14: #{tpu_custom_call.1} parent=1 // pred_check
      _
    $region15: #{tpu_custom_call.1} parent=1 // pred_check_branch
      %38 = sbr.rel (0) target = $region17
    $region16: #{tpu_custom_call.1} parent=1 // pred_region
      %40 = dma.done [#allocation3], 256
    $region17: #{tpu_custom_call.1} parent=1 // pred_fallthru
      _
    // Predicated region
    $region18: #{tpu_custom_call.1} parent=1 // pred_check
      _
    $region19: #{tpu_custom_call.1} parent=1 // pred_check_branch
      %42 = sbr.rel (0) target = $region21
    $region20: #{tpu_custom_call.1} parent=1 // pred_region
      %44 = dma.done [#allocation6], 16
    $region21: #{tpu_custom_call.1} parent=1 // pred_fallthru
      _
    %v45 = vld [vmem:[#allocation2] sm:$0xff]
    %v46 = vld [vmem:[#allocation2 + $0x8] sm:$0xff]
    %vm47 = vcmask 261120
    %v48 = vsel %vm47, %v45, 0.0
    %49 = vadd.xlane.f32.xlu0 %v48
    %v50 = vpop.xlane.xlu0 %49
    %v51 = vsel %vm47, %v46, 0.0
    %52 = vadd.xlane.f32.xlu0 %v51
    %v53 = vpop.xlane.xlu0 %52
    %v54 = vmul.f32 %v45, %v45
    %v55 = vmul.f32 %v46, %v46
    %v56 = vsel %vm47, %v54, 0.0
    %57 = vadd.xlane.f32.xlu0 %v56
    %v58 = vpop.xlane.xlu0 %57
    %v59 = vsel %vm47, %v55, 0.0
    %60 = vadd.xlane.f32.xlu0 %v59
    %v61 = vpop.xlane.xlu0 %60
    %v62 = vmul.f32 %v50, 0.03125
    %v63 = vmul.f32 %v53, 0.03125
    %v64 = vmul.f32 %v58, 0.03125
    %v65 = vmul.f32 %v61, 0.03125
    %v66 = vmul.f32 %v62, %v62
    %v67 = vmul.f32 %v63, %v63
    %v68 = vsub.f32 %v64, %v66
    %v69 = vsub.f32 %v65, %v67
    %v70 = vmax.f32 %v68, 0.0
    %v71 = vmax.f32 %v69, 0.0
    %v72 = vadd.f32 %v70, 1e-05
    %v73 = vadd.f32 %v71, 1e-05
    %v74 = vrsqrt.pop %v72
    %v75 = vmul.f32 %v74, %v72
    %v76 = vmul.f32 %v75, %v74
    %v77 = vmul.f32 0.5, %v76
    %v78 = vsub.f32 1.5, %v77
    %v79 = vmul.f32 %v74, %v78
    %vm80 = vweird.f32 %v72
    %vm81 = vweird.f32 %v74
    %vm82 = vmor %vm80, %vm81
    %v83 = vsel %vm82, %v74, %v79
    %v84 = vrsqrt.pop %v73
    %v85 = vmul.f32 %v84, %v73
    %v86 = vmul.f32 %v85, %v84
    %v87 = vmul.f32 0.5, %v86
    %v88 = vsub.f32 1.5, %v87
    %v89 = vmul.f32 %v84, %v88
    %vm90 = vweird.f32 %v73
    %vm91 = vweird.f32 %v84
    %vm92 = vmor %vm90, %vm91
    %v93 = vsel %vm92, %v84, %v89
    %v94 = vld [vmem:[#allocation5] sm:$0x1]
    %v95 = vld [vmem:[%s2] sm:$0x1]
    %v96 = vsub.f32 %v45, %v62
    %v97 = vsub.f32 %v46, %v63
    %v98 = vmul.f32 %v96, %v83
    %v99 = vmul.f32 %v97, %v93
    %v101 = vperm.slane %v94, 0
    %v103 = vmul.f32 %v98, %v101
    %v104 = vmul.f32 %v99, %v101
    %v106 = vperm.slane %v95, 0
    %v108 = vadd.f32 %v103, %v106
    %v109 = vadd.f32 %v104, %v106
    %110 = vst.msk [vmem:[#allocation7] sm:$0xff] %vm47, %v108
    %111 = vst.msk [vmem:[#allocation7 + $0x8] sm:$0xff] %vm47, %v109
    // Predicated region
    $region22: #{tpu_custom_call.1} parent=1 // pred_check
      _
    $region23: #{tpu_custom_call.1} parent=1 // pred_check_branch
      %113 = sbr.rel (0) target = $region25
    $region24: #{tpu_custom_call.1} parent=1 // pred_region
      %115 = vsyncadd [#allocation4], 0
      %s116 = sshll.u32 [#allocation7], 4
      %s117 = int_to_ptr.vmem [resolvable:$true] %s116
      %s118 = sshll.u32 %s3, 4
      %s119 = int_to_ptr.hbm [resolvable:$true] %s118
      %124 = dma.vmem_to_hbm [thread:$0]  %s117, 256, %s119, [#allocation4], 128, 128, 8
    $region25: #{tpu_custom_call.1} parent=1 // pred_fallthru
      _
    // Predicated region
    $region26: #{tpu_custom_call.1} parent=1 // pred_check
      _
    $region27: #{tpu_custom_call.1} parent=1 // pred_check_branch
      %126 = sbr.rel (0) target = $region29
    $region28: #{tpu_custom_call.1} parent=1 // pred_region
      %128 = dma.done [#allocation4], 256
    $region29: #{tpu_custom_call.1} parent=1 // pred_fallthru
      _
    %129 = vsyncpa [#allocation3], 1
    %130 = vsyncpa [#allocation6], 1
    %131 = vsyncpa [#allocation4], 1

</llo_original>
